<compile_context>
chip_gen: v6e
topology: v6e:2x2x1
jax: 0.10.0
libtpu: 0.0.40
codegen_flags: <defaults>
</compile_context>

<pallas_src>
import functools

import jax
import jax.numpy as jnp
import numpy as np
from jax.experimental import pallas as pl
from jax.experimental.pallas import tpu as pltpu


def _learned_pdf_mc_kernel(x_ref, t_ref, expand_ref, selmc_ref,
                           w1x_ref, w1t_ref, b1_ref, w2_ref, b2_ref, w3_ref,
                           b3_ref, pdf_ref, *, mc_samples, range_width):
    """One batch tile: 3-layer MLP at S1 t-points + MC pdf normalization.

    Shapes (per tile, N = Bt * S1, sample-major rows: row = j*Bt + b):
      x_ref      (Bt, V)   f32   CLS-pair embeddings for this tile
      t_ref      (N, 1)    f32   t value for every (sample, batch) row
      expand_ref (N, Bt)   f32   0/1: row n copies batch row n % Bt
      selmc_ref  (Bt, N)   f32   0/1: MC rows (j >= 1) of batch b
      w1x_ref    (V, H1)   bf16  W1[:V]
      w1t_ref    (1, H1)   f32   W1[V]  (rank-1 t weight row)
      b1_ref     (1, H1)   f32
      w2_ref     (H1, H2)  bf16
      b2_ref     (1, H2)   f32
      w3_ref     (1, H2)   f32   W3 transposed to a row
      b3_ref     (1, 1)    f32   scalar bias, SMEM
      pdf_ref    (Bt, 1)   f32   normalized density at the query t
    """
    bt = pdf_ref.shape[0]

    # ---- layer 1 (rank-1 restructure: x part computed once per batch row) ---
    xw = jnp.dot(x_ref[...].astype(jnp.bfloat16), w1x_ref[...],
                 preferred_element_type=jnp.float32)                # (Bt, H1)
    # Replicate across the S1 samples via a tiny constant 0/1 matmul (K = Bt).
    xw_rep = jnp.dot(expand_ref[...], xw,
                     preferred_element_type=jnp.float32)            # (N, H1)
    h1 = jnp.maximum(xw_rep + t_ref[...] * w1t_ref[...] + b1_ref[...], 0.0)
    # dropout (p=0.1) is the identity at inference time.

    # ---- layer 2 (bf16 MXU, f32 accumulate) --------------------------------
    h2 = jnp.maximum(
        jnp.dot(h1.astype(jnp.bfloat16), w2_ref[...],
                preferred_element_type=jnp.float32) + b2_ref[...], 0.0)

    # ---- layer 3: VPU multiply + lane reduce (no width-1 MXU matmul) -------
    logit = jnp.sum(h2 * w3_ref[...], axis=-1, keepdims=True) + b3_ref[0, 0]

    # ---- stable exp + Monte-Carlo normalization ----------------------------
    # A single tile-wide max cancels exactly in the ratio below.
    m = jnp.max(logit)
    e = jnp.exp(logit - m)                                          # (N, 1)

    # Sample-major ordering: rows [0, Bt) are the query rows of this tile.
    num = e[:bt, :]                                                 # (Bt, 1)
    zsum = jnp.dot(selmc_ref[...], e,
                   preferred_element_type=jnp.float32)              # (Bt, 1)
    # pdf = exp(l_q) / (mean_j exp(l_mc_j) * width) = num * S / (zsum * width)
    # (if every MC exp underflows zsum == 0 -> inf, matching the reference).
    pdf_ref[...] = num * (mc_samples / range_width) / zsum


def learned_pdf_mc_forward(x, t, t_mc, params, target_range, *,
                           block_batch=None):
    """Wrapper: builds cheap O(B*S1) index/constant arrays and calls the kernel."""
    B, V = x.shape
    S = int(t_mc.shape[0])
    S1 = S + 1
    H1 = params["w1"].shape[1]
    H2 = params["w2"].shape[1]

    if block_batch is None:
        block_batch = 8 if (B % 8 == 0 and B >= 8) else B
    Bt = block_batch
    if B % Bt != 0 or not (Bt == B or Bt % 8 == 0):
        raise ValueError("block_batch must divide B and be a multiple of 8 "
                         "(or equal B).")
    n_tiles = B // Bt
    N = Bt * S1                 # rows per tile (sample-major: row = j*Bt + b)

    # t for every (batch, sample): column 0 = query t, columns 1.. = MC points.
    t_all = jnp.concatenate(
        [t.reshape(B, 1), jnp.broadcast_to(t_mc[None, :], (B, S))], axis=1)
    # Reorder to tile-local sample-major rows: global row = i*N + j*Bt + b.
    t_col = (t_all.reshape(n_tiles, Bt, S1).transpose(0, 2, 1)
             .reshape(B * S1, 1).astype(jnp.float32))

    # Constant per-tile 0/1 matrices (identical for every tile -> resident).
    rows = np.arange(N)
    j_idx, b_idx = rows // Bt, rows % Bt
    expand = jnp.asarray(
        (b_idx[:, None] == np.arange(Bt)[None, :]).astype(np.float32))   # (N, Bt)
    sel_mc = jnp.asarray(
        ((b_idx[None, :] == np.arange(Bt)[:, None]) &
         (j_idx[None, :] >= 1)).astype(np.float32))                      # (Bt, N)

    # Parameter layout for the kernel (weights cast to bf16 for the MXU).
    w1 = params["w1"]
    w1x = w1[:V, :].astype(jnp.bfloat16)                 # (V, H1)
    w1t = w1[V:V + 1, :].astype(jnp.float32)             # (1, H1)
    b1 = params["b1"].reshape(1, H1).astype(jnp.float32)
    w2 = params["w2"].astype(jnp.bfloat16)               # (H1, H2)
    b2 = params["b2"].reshape(1, H2).astype(jnp.float32)
    w3r = params["w3"].reshape(1, H2).astype(jnp.float32)
    b3 = params["b3"].reshape(1, 1).astype(jnp.float32)

    range_width = float(target_range[1] - target_range[0])
    kernel = functools.partial(_learned_pdf_mc_kernel,
                               mc_samples=float(S), range_width=range_width)

    pdf = pl.pallas_call(
        kernel,
        out_shape=jax.ShapeDtypeStruct((B, 1), jnp.float32),
        grid=(n_tiles,),
        in_specs=[
            pl.BlockSpec((Bt, V), lambda i: (i, 0)),             # x
            pl.BlockSpec((N, 1), lambda i: (i, 0)),              # t per row
            pl.BlockSpec((N, Bt), lambda i: (0, 0)),             # expand (const)
            pl.BlockSpec((Bt, N), lambda i: (0, 0)),             # sel_mc (const)
            pl.BlockSpec((V, H1), lambda i: (0, 0)),             # w1x (resident)
            pl.BlockSpec((1, H1), lambda i: (0, 0)),             # w1t
            pl.BlockSpec((1, H1), lambda i: (0, 0)),             # b1
            pl.BlockSpec((H1, H2), lambda i: (0, 0)),            # w2 (resident)
            pl.BlockSpec((1, H2), lambda i: (0, 0)),             # b2
            pl.BlockSpec((1, H2), lambda i: (0, 0)),             # w3 row
            pl.BlockSpec(memory_space=pltpu.MemorySpace.SMEM),   # b3 scalar
        ],
        out_specs=pl.BlockSpec((Bt, 1), lambda i: (i, 0)),
        compiler_params=pltpu.CompilerParams(
            dimension_semantics=("parallel",)),
    )(x, t_col, expand, sel_mc, w1x, w1t, b1, w2, b2, w3r, b3)
    return pdf


def _reference_forward(x, t, t_mc, params, target_range):
    """Pure-JAX (f32) reference of the same math, for a sanity check."""
    B = x.shape[0]
    S = t_mc.shape[0]
    t_all = jnp.concatenate([t, jnp.tile(t_mc[None, :], (B, 1))], axis=1)
    xt = jnp.concatenate(
        [jnp.repeat(x, S + 1, axis=0), t_all.reshape(-1, 1)], axis=1)
    h1 = jnp.maximum(xt @ params["w1"] + params["b1"], 0.0)
    h2 = jnp.maximum(h1 @ params["w2"] + params["b2"], 0.0)
    lg = (h2 @ params["w3"] + params["b3"]).reshape(B, S + 1)
    width = target_range[1] - target_range[0]
    z = jnp.mean(jnp.exp(lg[:, 1:]), axis=1, keepdims=True) * width
    return jnp.exp(lg[:, 0:1]) / z


if __name__ == "__main__":
    # Small shapes consistent with the module (scaled down from
    # transformer_dim=768, hidden_dims=[1024,1024], mc_samples=60).  B=16 with
    # block_batch=8 exercises a 2-step batch-tiled grid with resident weights.
    B = 16           # batch (number of sentence pairs)
    D = 32           # transformer hidden dim (stand-in)
    H1, H2 = 128, 128
    S = 8            # mc_samples
    delta_t = 0.01
    target_range = (0.0, 1.0)
    t_range = jnp.arange(target_range[0], target_range[1], delta_t)  # parity; unused by forward

    key = jax.random.PRNGKey(0)
    keys = jax.random.split(key, 10)

    # TODO(synk): the pretrained HuggingFace BERT/DistilBERT encoder + tokenizer
    # cannot be loaded here; s1/s2 stand in for last_hidden_state[:, 0, :]
    # (the CLS embeddings) produced by sentence_embed().
    s1 = jax.random.normal(keys[0], (B, D), jnp.float32)
    s2 = jax.random.normal(keys[1], (B, D), jnp.float32)
    x = jnp.concatenate([s1, s2], axis=1)                 # st_forward concat -> (B, 2D)

    t = jax.random.uniform(keys[2], (B, 1), jnp.float32, 0.0, 1.0)     # query t
    t_mc = jax.random.uniform(keys[3], (S,), jnp.float32, 0.0, 1.0)    # MC sample points

    V = 2 * D

    def linear_init(kw, kb, fan_in, fan_out):
        bound = 1.0 / np.sqrt(fan_in)
        w = jax.random.uniform(kw, (fan_in, fan_out), jnp.float32, -bound, bound)
        b = jax.random.uniform(kb, (1, fan_out), jnp.float32, -bound, bound)
        return w, b

    w1, b1 = linear_init(keys[4], keys[5], V + 1, H1)
    w2, b2 = linear_init(keys[6], keys[7], H1, H2)
    w3, b3 = linear_init(keys[8], keys[9], H2, 1)
    params = dict(w1=w1, b1=b1, w2=w2, b2=b2, w3=w3, b3=b3)

    pdf = learned_pdf_mc_forward(x, t, t_mc, params, target_range)
    pdf = jax.block_until_ready(pdf)

    ref = _reference_forward(x, t, t_mc, params, target_range)
    np.testing.assert_allclose(np.asarray(pdf), np.asarray(ref),
                               rtol=2e-2, atol=2e-3)
    print("KERNEL_OK")
</pallas_src>

<mosaic_0001>
module attributes {stable_mosaic.version = 11 : i64} {
  func.func @_learned_pdf_mc_kernel(%arg0: i32, %arg1: memref<8x64xf32, #tpu.memory_space<vmem>>, %arg2: memref<72x1xf32, #tpu.memory_space<vmem>>, %arg3: memref<72x8xf32, #tpu.memory_space<vmem>>, %arg4: memref<8x72xf32, #tpu.memory_space<vmem>>, %arg5: memref<64x128xbf16, #tpu.memory_space<vmem>>, %arg6: memref<1x128xf32, #tpu.memory_space<vmem>>, %arg7: memref<1x128xf32, #tpu.memory_space<vmem>>, %arg8: memref<128x128xbf16, #tpu.memory_space<vmem>>, %arg9: memref<1x128xf32, #tpu.memory_space<vmem>>, %arg10: memref<1x128xf32, #tpu.memory_space<vmem>>, %arg11: memref<1x1xf32, #tpu.memory_space<smem>>, %arg12: memref<8x1xf32, #tpu.memory_space<vmem>>) attributes {dimension_semantics = [#tpu.dimension_semantics<parallel>], iteration_bounds = array<i64: 2>, scalar_prefetch = 0 : i64, scratch_operands = 0 : i64, tpu.core_type = #tpu.core_type<tc>, window_params = [{transform_indices = @transform_0, window_bounds = array<i64: 8, 64>}, {transform_indices = @transform_1, window_bounds = array<i64: 72, 1>}, {pipeline_mode = #tpu.pipeline_mode<synchronous>, transform_indices = @transform_2, window_bounds = array<i64: 72, 8>}, {pipeline_mode = #tpu.pipeline_mode<synchronous>, transform_indices = @transform_3, window_bounds = array<i64: 8, 72>}, {pipeline_mode = #tpu.pipeline_mode<synchronous>, transform_indices = @transform_4, window_bounds = array<i64: 64, 128>}, {pipeline_mode = #tpu.pipeline_mode<synchronous>, transform_indices = @transform_5, window_bounds = array<i64: 1, 128>}, {pipeline_mode = #tpu.pipeline_mode<synchronous>, transform_indices = @transform_6, window_bounds = array<i64: 1, 128>}, {pipeline_mode = #tpu.pipeline_mode<synchronous>, transform_indices = @transform_7, window_bounds = array<i64: 128, 128>}, {pipeline_mode = #tpu.pipeline_mode<synchronous>, transform_indices = @transform_8, window_bounds = array<i64: 1, 128>}, {pipeline_mode = #tpu.pipeline_mode<synchronous>, transform_indices = @transform_9, window_bounds = array<i64: 1, 128>}, {transform_indices = @transform_10, window_bounds = array<i64: 1, 1>}, {transform_indices = @transform_11, window_bounds = array<i64: 8, 1>}]} {
    %c0 = arith.constant 0 : index
    %c0_0 = arith.constant 0 : index
    %0 = vector.load %arg1[%c0, %c0_0] : memref<8x64xf32, #tpu.memory_space<vmem>>, vector<8x64xf32>
    %1 = arith.truncf %0 : vector<8x64xf32> to vector<8x64xbf16>
    %c0_1 = arith.constant 0 : index
    %c0_2 = arith.constant 0 : index
    %2 = vector.load %arg5[%c0_1, %c0_2] : memref<64x128xbf16, #tpu.memory_space<vmem>>, vector<64x128xbf16>
    %cst = arith.constant dense<0.000000e+00> : vector<8x128xf32>
    %3 = tpu.matmul %1, %2, %cst {dimension_numbers = #tpu.dot_dimension_numbers<[1], [0], [0], [1], [0, 0, 1, 1], [], []>} : vector<8x64xbf16>, vector<64x128xbf16>, vector<8x128xf32> -> vector<8x128xf32>
    %c0_3 = arith.constant 0 : index
    %c0_4 = arith.constant 0 : index
    %4 = vector.load %arg3[%c0_3, %c0_4] : memref<72x8xf32, #tpu.memory_space<vmem>>, vector<72x8xf32>
    %cst_5 = arith.constant dense<0.000000e+00> : vector<72x128xf32>
    %5 = tpu.matmul %4, %3, %cst_5 {dimension_numbers = #tpu.dot_dimension_numbers<[1], [0], [0], [1], [0, 0, 1, 1], [], []>} : vector<72x8xf32>, vector<8x128xf32>, vector<72x128xf32> -> vector<72x128xf32>
    %c0_6 = arith.constant 0 : index
    %c0_7 = arith.constant 0 : index
    %6 = vector.load %arg2[%c0_6, %c0_7] : memref<72x1xf32, #tpu.memory_space<vmem>>, vector<72x1xf32>
    %c0_8 = arith.constant 0 : index
    %c0_9 = arith.constant 0 : index
    %7 = vector.load %arg6[%c0_8, %c0_9] : memref<1x128xf32, #tpu.memory_space<vmem>>, vector<1x128xf32>
    %8 = vector.broadcast %6 : vector<72x1xf32> to vector<72x128xf32>
    %9 = vector.broadcast %7 : vector<1x128xf32> to vector<72x128xf32>
    %10 = arith.mulf %8, %9 : vector<72x128xf32>
    %11 = arith.addf %5, %10 : vector<72x128xf32>
    %c0_10 = arith.constant 0 : index
    %c0_11 = arith.constant 0 : index
    %12 = vector.load %arg7[%c0_10, %c0_11] : memref<1x128xf32, #tpu.memory_space<vmem>>, vector<1x128xf32>
    %13 = vector.broadcast %12 : vector<1x128xf32> to vector<72x128xf32>
    %14 = arith.addf %11, %13 : vector<72x128xf32>
    %cst_12 = arith.constant 0.000000e+00 : f32
    %15 = vector.broadcast %cst_12 : f32 to vector<72x128xf32>
    %16 = arith.maximumf %14, %15 : vector<72x128xf32>
    %17 = arith.truncf %16 : vector<72x128xf32> to vector<72x128xbf16>
    %c0_13 = arith.constant 0 : index
    %c0_14 = arith.constant 0 : index
    %18 = vector.load %arg8[%c0_13, %c0_14] : memref<128x128xbf16, #tpu.memory_space<vmem>>, vector<128x128xbf16>
    %cst_15 = arith.constant dense<0.000000e+00> : vector<72x128xf32>
    %19 = tpu.matmul %17, %18, %cst_15 {dimension_numbers = #tpu.dot_dimension_numbers<[1], [0], [0], [1], [0, 0, 1, 1], [], []>} : vector<72x128xbf16>, vector<128x128xbf16>, vector<72x128xf32> -> vector<72x128xf32>
    %c0_16 = arith.constant 0 : index
    %c0_17 = arith.constant 0 : index
    %20 = vector.load %arg9[%c0_16, %c0_17] : memref<1x128xf32, #tpu.memory_space<vmem>>, vector<1x128xf32>
    %21 = vector.broadcast %20 : vector<1x128xf32> to vector<72x128xf32>
    %22 = arith.addf %19, %21 : vector<72x128xf32>
    %cst_18 = arith.constant 0.000000e+00 : f32
    %23 = vector.broadcast %cst_18 : f32 to vector<72x128xf32>
    %24 = arith.maximumf %22, %23 : vector<72x128xf32>
    %c0_19 = arith.constant 0 : index
    %c0_20 = arith.constant 0 : index
    %25 = vector.load %arg10[%c0_19, %c0_20] : memref<1x128xf32, #tpu.memory_space<vmem>>, vector<1x128xf32>
    %26 = vector.broadcast %25 : vector<1x128xf32> to vector<72x128xf32>
    %27 = arith.mulf %24, %26 : vector<72x128xf32>
    %cst_21 = arith.constant dense<0.000000e+00> : vector<72xf32>
    %28 = vector.multi_reduction <add>, %27, %cst_21 [1] : vector<72x128xf32> to vector<72xf32>
    %29 = vector.shape_cast %28 : vector<72xf32> to vector<72x1xf32>
    %c0_22 = arith.constant 0 : index
    %c0_23 = arith.constant 0 : index
    %30 = memref.load %arg11[%c0_22, %c0_23] : memref<1x1xf32, #tpu.memory_space<smem>>
    %31 = vector.broadcast %30 : f32 to vector<72x1xf32>
    %32 = arith.addf %29, %31 : vector<72x1xf32>
    %33 = vector.shape_cast %32 : vector<72x1xf32> to vector<1x72x1xf32>
    %cst_24 = arith.constant dense<0xFF800000> : vector<1xf32>
    %34 = vector.multi_reduction <maximumf>, %33, %cst_24 [1, 2] : vector<1x72x1xf32> to vector<1xf32>
    %35 = vector.shape_cast %34 : vector<1xf32> to vector<1x1x1xf32>
    %36 = vector.extract %35[0, 0, 0] : f32 from vector<1x1x1xf32>
    %37 = vector.broadcast %36 : f32 to vector<72x1xf32>
    %38 = arith.subf %32, %37 : vector<72x1xf32>
    %39 = math.exp %38 : vector<72x1xf32>
    %40 = vector.extract_strided_slice %39 {offsets = [0, 0], sizes = [8, 1], strides = [1, 1]} : vector<72x1xf32> to vector<8x1xf32>
    %c0_25 = arith.constant 0 : index
    %c0_26 = arith.constant 0 : index
    %41 = vector.load %arg4[%c0_25, %c0_26] : memref<8x72xf32, #tpu.memory_space<vmem>>, vector<8x72xf32>
    %cst_27 = arith.constant dense<0.000000e+00> : vector<8x1xf32>
    %42 = tpu.matmul %41, %39, %cst_27 {dimension_numbers = #tpu.dot_dimension_numbers<[1], [0], [0], [1], [0, 0, 1, 1], [], []>} : vector<8x72xf32>, vector<72x1xf32>, vector<8x1xf32> -> vector<8x1xf32>
    %cst_28 = arith.constant 8.000000e+00 : f32
    %43 = vector.broadcast %cst_28 : f32 to vector<8x1xf32>
    %44 = arith.mulf %40, %43 : vector<8x1xf32>
    %45 = arith.divf %44, %42 : vector<8x1xf32>
    %c0_29 = arith.constant 0 : index
    %c0_30 = arith.constant 0 : index
    %46 = vector.load %arg12[%c0_29, %c0_30] : memref<8x1xf32, #tpu.memory_space<vmem>>, vector<8x1xf32>
    tpu.vector_store %arg12[%c0_29, %c0_30], %45 {strides = array<i32>} : memref<8x1xf32, #tpu.memory_space<vmem>>, vector<8x1xf32>,
    return
  }
  func.func @transform_0(%arg0: i32) -> (i32, i32) {
    %c0_i32 = arith.constant 0 : i32
    %c0_i32_0 = arith.constant 0 : i32
    return %arg0, %c0_i32 : i32, i32
  }
  func.func @transform_1(%arg0: i32) -> (i32, i32) {
    %c0_i32 = arith.constant 0 : i32
    %c0_i32_0 = arith.constant 0 : i32
    return %arg0, %c0_i32 : i32, i32
  }
  func.func @transform_2(%arg0: i32) -> (i32, i32) {
    %c0_i32 = arith.constant 0 : i32
    %c0_i32_0 = arith.constant 0 : i32
    %c0_i32_1 = arith.constant 0 : i32
    return %c0_i32, %c0_i32_0 : i32, i32
  }
  func.func @transform_3(%arg0: i32) -> (i32, i32) {
    %c0_i32 = arith.constant 0 : i32
    %c0_i32_0 = arith.constant 0 : i32
    %c0_i32_1 = arith.constant 0 : i32
    return %c0_i32, %c0_i32_0 : i32, i32
  }
  func.func @transform_4(%arg0: i32) -> (i32, i32) {
    %c0_i32 = arith.constant 0 : i32
    %c0_i32_0 = arith.constant 0 : i32
    %c0_i32_1 = arith.constant 0 : i32
    return %c0_i32, %c0_i32_0 : i32, i32
  }
  func.func @transform_5(%arg0: i32) -> (i32, i32) {
    %c0_i32 = arith.constant 0 : i32
    %c0_i32_0 = arith.constant 0 : i32
    %c0_i32_1 = arith.constant 0 : i32
    return %c0_i32, %c0_i32_0 : i32, i32
  }
  func.func @transform_6(%arg0: i32) -> (i32, i32) {
    %c0_i32 = arith.constant 0 : i32
    %c0_i32_0 = arith.constant 0 : i32
    %c0_i32_1 = arith.constant 0 : i32
    return %c0_i32, %c0_i32_0 : i32, i32
  }
  func.func @transform_7(%arg0: i32) -> (i32, i32) {
    %c0_i32 = arith.constant 0 : i32
    %c0_i32_0 = arith.constant 0 : i32
    %c0_i32_1 = arith.constant 0 : i32
    return %c0_i32, %c0_i32_0 : i32, i32
  }
  func.func @transform_8(%arg0: i32) -> (i32, i32) {
    %c0_i32 = arith.constant 0 : i32
    %c0_i32_0 = arith.constant 0 : i32
    %c0_i32_1 = arith.constant 0 : i32
    return %c0_i32, %c0_i32_0 : i32, i32
  }
  func.func @transform_9(%arg0: i32) -> (i32, i32) {
    %c0_i32 = arith.constant 0 : i32
    %c0_i32_0 = arith.constant 0 : i32
    %c0_i32_1 = arith.constant 0 : i32
    return %c0_i32, %c0_i32_0 : i32, i32
  }
  func.func @transform_10(%arg0: i32) -> (i32, i32) {
    %c0_i32 = arith.constant 0 : i32
    %c0_i32_0 = arith.constant 0 : i32
    %c0_i32_1 = arith.constant 0 : i32
    return %c0_i32, %c0_i32_0 : i32, i32
  }
  func.func @transform_11(%arg0: i32) -> (i32, i32) {
    %c0_i32 = arith.constant 0 : i32
    %c0_i32_0 = arith.constant 0 : i32
    return %arg0, %c0_i32 : i32, i32
  }
}

</mosaic_0001>

<llo_original>
// kernel: tpu_custom_call.1
$region0: #{tpu_custom_call.1}
  #allocation0 [shape = 'u32[]', space=smem, size = 0x4, offset = 0x4, fixed_abs, tag = 'smem constant byte address 0x4 - core index']
  #allocation1 [shape = 'u32[144,128]{1,0:T(1,128)}', space=vmem, size = 0x12000, scoped, tag = 'internal scratch']
  #allocation2 [shape = 'f32[1,1]{1,0:T(1,128)S(6)}', space=smem, size = 0x200, scoped, tag = 'scoped memory for tpu_custom_call.1']
  %s0 = inlined_call_operand.vmem [shape: f32[16,64], index: 0, kind: input, shape index: {}]
  %s1 = inlined_call_operand.vmem [shape: f32[144,1], index: 1, kind: input, shape index: {}]
  %s2 = inlined_call_operand.vmem [shape: f32[72,8], index: 2, kind: input, shape index: {}]
  %s3 = inlined_call_operand.vmem [shape: f32[8,72], index: 3, kind: input, shape index: {}]
  %s4 = inlined_call_operand.vmem [shape: bf16[64,128], index: 4, kind: input, shape index: {}]
  %s5 = inlined_call_operand.vmem [shape: f32[1,128], index: 5, kind: input, shape index: {}]
  %s6 = inlined_call_operand.vmem [shape: f32[1,128], index: 6, kind: input, shape index: {}]
  %s7 = inlined_call_operand.vmem [shape: bf16[128,128], index: 7, kind: input, shape index: {}]
  %s8 = inlined_call_operand.vmem [shape: f32[1,128], index: 8, kind: input, shape index: {}]
  %s9 = inlined_call_operand.vmem [shape: f32[1,128], index: 9, kind: input, shape index: {}]
  %s10 = inlined_call_operand.<no memory space> [shape: f32[1,1], index: 10, kind: input, shape index: {}]
  %s11 = inlined_call_operand.vmem [shape: f32[16,1], index: 11, kind: output, shape index: {}]
  %s12 = sld [smem:[#allocation0]]
  $region77: #{tpu_custom_call.1} parent=0
    _
  %s14 = ssub.s32 1, %s12
  %s15 = scalar_select 0, %s14, %s12
  %16 = sst [smem:[#allocation2]] %s10
  loop: start=0, step=1, limit=4
  $region2: #{tpu_custom_call.1} parent=0 // loop_pre_header
    _
  $region3: #{tpu_custom_call.1} parent=0 // loop_header
    %s18 = sphi 0, %s22
    %p19 = scmp.ge.s32.totalorder %s18, 4
    %s28 = sphi 0, %s30
    %s31 = sphi 0, %s28
    %s32 = sphi 0, %s31
    %s48 = sphi 0, %s32
    %s54 = sphi 0, %s56
    %s57 = sphi 0, %s54
    %s58 = sphi 0, %s57
    %s74 = sphi 0, %s58
    %s78 = sphi 0, %s78
    %s80 = sphi 0, %s78
    %s81 = sphi 0, %s80
    %s95 = sphi 0, %s81
    %s99 = sphi 0, %s99
    %s101 = sphi 0, %s99
    %s102 = sphi 0, %s101
    %s116 = sphi 0, %s102
    %s120 = sphi 0, %s120
    %s122 = sphi 0, %s120
    %s123 = sphi 0, %s122
    %s137 = sphi 0, %s123
    %s141 = sphi 0, %s141
    %s143 = sphi 0, %s141
    %s144 = sphi 0, %s143
    %s158 = sphi 0, %s144
    %s162 = sphi 0, %s162
    %s164 = sphi 0, %s162
    %s165 = sphi 0, %s164
    %s179 = sphi 0, %s165
    %s183 = sphi 0, %s183
    %s185 = sphi 0, %s183
    %s186 = sphi 0, %s185
    %s200 = sphi 0, %s186
    %s204 = sphi 0, %s204
    %s206 = sphi 0, %s204
    %s207 = sphi 0, %s206
    %s221 = sphi 0, %s207
    %s225 = sphi 0, %s225
    %s227 = sphi 0, %s225
    %s228 = sphi 0, %s227
    %s242 = sphi 0, %s228
    %s246 = sphi 0, %s246
    %s248 = sphi 0, %s246
    %s249 = sphi 0, %s248
    %s263 = sphi 0, %s249
    %s269 = sphi 0, %s271
    %s272 = sphi 0, %s269
    %s273 = sphi 0, %s272
    %s289 = sphi 0, %s273
  $region4: #{tpu_custom_call.1} parent=0 // loop_header_branch
    %21 = sbr.rel (%p19) target = $region8
  $region5: #{tpu_custom_call.1} parent=0 // loop_body
    %s23 = ssub.s32 %s18, 1
    %s24 = ssub.s32 %s18, 2
    %s25 = sadd.s32 %s18, 1
    %s26 = ssub.s32 %s18, %s25
    %p27 = scmp.eq.s32.totalorder %s26, 0
    %s29 = sadd.s32 %s28, 1
    %s30 = scalar_select %p27, %s28, %s29
    %p33 = pneg %p27
    %p34 = scmp.eq.s32.totalorder %s18, 1
    %p35 = por %p33, %p34
    %p36 = scmp.ne.s32.totalorder %s28, %s31
    %p37 = scmp.eq.s32.totalorder %s18, 0
    %p38 = por %p36, %p37
    %p39 = scmp.ne.s32.totalorder %s28, %s31
    %p40 = scmp.eq.s32.totalorder %s23, 1
    %p41 = por %p39, %p40
    %p42 = scmp.ne.s32.totalorder %s31, %s32
    %p43 = scmp.eq.s32.totalorder %s23, 0
    %p44 = por %p42, %p43
    %p45 = scmp.ne.s32.totalorder %s31, %s32
    %p46 = scmp.eq.s32.totalorder %s24, 1
    %p47 = por %p45, %p46
    %p49 = scmp.ne.s32.totalorder %s32, %s48
    %p50 = scmp.eq.s32.totalorder %s24, 0
    %p51 = por %p49, %p50
    %s52 = ssub.s32 %s18, %s25
    %p53 = scmp.eq.s32.totalorder %s52, 0
    %s55 = sadd.s32 %s54, 1
    %s56 = scalar_select %p53, %s54, %s55
    %p59 = pneg %p53
    %p60 = scmp.eq.s32.totalorder %s18, 1
    %p61 = por %p59, %p60
    %p62 = scmp.ne.s32.totalorder %s54, %s57
    %p63 = scmp.eq.s32.totalorder %s18, 0
    %p64 = por %p62, %p63
    %p65 = scmp.ne.s32.totalorder %s54, %s57
    %p66 = scmp.eq.s32.totalorder %s23, 1
    %p67 = por %p65, %p66
    %p68 = scmp.ne.s32.totalorder %s57, %s58
    %p69 = scmp.eq.s32.totalorder %s23, 0
    %p70 = por %p68, %p69
    %p71 = scmp.ne.s32.totalorder %s57, %s58
    %p72 = scmp.eq.s32.totalorder %s24, 1
    %p73 = por %p71, %p72
    %p75 = scmp.ne.s32.totalorder %s58, %s74
    %p76 = scmp.eq.s32.totalorder %s24, 0
    %p77 = por %p75, %p76
    %s79 = sadd.s32 %s78, 1
    %p82 = scmp.eq.s32.totalorder %s18, 1
    %p83 = scmp.ne.s32.totalorder %s78, %s80
    %p84 = scmp.eq.s32.totalorder %s18, 0
    %p85 = por %p83, %p84
    %p86 = scmp.ne.s32.totalorder %s78, %s80
    %p87 = scmp.eq.s32.totalorder %s23, 1
    %p88 = por %p86, %p87
    %p89 = scmp.ne.s32.totalorder %s80, %s81
    %p90 = scmp.eq.s32.totalorder %s23, 0
    %p91 = por %p89, %p90
    %p92 = scmp.ne.s32.totalorder %s80, %s81
    %p93 = scmp.eq.s32.totalorder %s24, 1
    %p94 = por %p92, %p93
    %p96 = scmp.ne.s32.totalorder %s81, %s95
    %p97 = scmp.eq.s32.totalorder %s24, 0
    %p98 = por %p96, %p97
    %s100 = sadd.s32 %s99, 1
    %p103 = scmp.eq.s32.totalorder %s18, 1
    %p104 = scmp.ne.s32.totalorder %s99, %s101
    %p105 = scmp.eq.s32.totalorder %s18, 0
    %p106 = por %p104, %p105
    %p107 = scmp.ne.s32.totalorder %s99, %s101
    %p108 = scmp.eq.s32.totalorder %s23, 1
    %p109 = por %p107, %p108
    %p110 = scmp.ne.s32.totalorder %s101, %s102
    %p111 = scmp.eq.s32.totalorder %s23, 0
    %p112 = por %p110, %p111
    %p113 = scmp.ne.s32.totalorder %s101, %s102
    %p114 = scmp.eq.s32.totalorder %s24, 1
    %p115 = por %p113, %p114
    %p117 = scmp.ne.s32.totalorder %s102, %s116
    %p118 = scmp.eq.s32.totalorder %s24, 0
    %p119 = por %p117, %p118
    %s121 = sadd.s32 %s120, 1
    %p124 = scmp.eq.s32.totalorder %s18, 1
    %p125 = scmp.ne.s32.totalorder %s120, %s122
    %p126 = scmp.eq.s32.totalorder %s18, 0
    %p127 = por %p125, %p126
    %p128 = scmp.ne.s32.totalorder %s120, %s122
    %p129 = scmp.eq.s32.totalorder %s23, 1
    %p130 = por %p128, %p129
    %p131 = scmp.ne.s32.totalorder %s122, %s123
    %p132 = scmp.eq.s32.totalorder %s23, 0
    %p133 = por %p131, %p132
    %p134 = scmp.ne.s32.totalorder %s122, %s123
    %p135 = scmp.eq.s32.totalorder %s24, 1
    %p136 = por %p134, %p135
    %p138 = scmp.ne.s32.totalorder %s123, %s137
    %p139 = scmp.eq.s32.totalorder %s24, 0
    %p140 = por %p138, %p139
    %s142 = sadd.s32 %s141, 1
    %p145 = scmp.eq.s32.totalorder %s18, 1
    %p146 = scmp.ne.s32.totalorder %s141, %s143
    %p147 = scmp.eq.s32.totalorder %s18, 0
    %p148 = por %p146, %p147
    %p149 = scmp.ne.s32.totalorder %s141, %s143
    %p150 = scmp.eq.s32.totalorder %s23, 1
    %p151 = por %p149, %p150
    %p152 = scmp.ne.s32.totalorder %s143, %s144
    %p153 = scmp.eq.s32.totalorder %s23, 0
    %p154 = por %p152, %p153
    %p155 = scmp.ne.s32.totalorder %s143, %s144
    %p156 = scmp.eq.s32.totalorder %s24, 1
    %p157 = por %p155, %p156
    %p159 = scmp.ne.s32.totalorder %s144, %s158
    %p160 = scmp.eq.s32.totalorder %s24, 0
    %p161 = por %p159, %p160
    %s163 = sadd.s32 %s162, 1
    %p166 = scmp.eq.s32.totalorder %s18, 1
    %p167 = scmp.ne.s32.totalorder %s162, %s164
    %p168 = scmp.eq.s32.totalorder %s18, 0
    %p169 = por %p167, %p168
    %p170 = scmp.ne.s32.totalorder %s162, %s164
    %p171 = scmp.eq.s32.totalorder %s23, 1
    %p172 = por %p170, %p171
    %p173 = scmp.ne.s32.totalorder %s164, %s165
    %p174 = scmp.eq.s32.totalorder %s23, 0
    %p175 = por %p173, %p174
    %p176 = scmp.ne.s32.totalorder %s164, %s165
    %p177 = scmp.eq.s32.totalorder %s24, 1
    %p178 = por %p176, %p177
    %p180 = scmp.ne.s32.totalorder %s165, %s179
    %p181 = scmp.eq.s32.totalorder %s24, 0
    %p182 = por %p180, %p181
    %s184 = sadd.s32 %s183, 1
    %p187 = scmp.eq.s32.totalorder %s18, 1
    %p188 = scmp.ne.s32.totalorder %s183, %s185
    %p189 = scmp.eq.s32.totalorder %s18, 0
    %p190 = por %p188, %p189
    %p191 = scmp.ne.s32.totalorder %s183, %s185
    %p192 = scmp.eq.s32.totalorder %s23, 1
    %p193 = por %p191, %p192
    %p194 = scmp.ne.s32.totalorder %s185, %s186
    %p195 = scmp.eq.s32.totalorder %s23, 0
    %p196 = por %p194, %p195
    %p197 = scmp.ne.s32.totalorder %s185, %s186
    %p198 = scmp.eq.s32.totalorder %s24, 1
    %p199 = por %p197, %p198
    %p201 = scmp.ne.s32.totalorder %s186, %s200
    %p202 = scmp.eq.s32.totalorder %s24, 0
    %p203 = por %p201, %p202
    %s205 = sadd.s32 %s204, 1
    %p208 = scmp.eq.s32.totalorder %s18, 1
    %p209 = scmp.ne.s32.totalorder %s204, %s206
    %p210 = scmp.eq.s32.totalorder %s18, 0
    %p211 = por %p209, %p210
    %p212 = scmp.ne.s32.totalorder %s204, %s206
    %p213 = scmp.eq.s32.totalorder %s23, 1
    %p214 = por %p212, %p213
    %p215 = scmp.ne.s32.totalorder %s206, %s207
    %p216 = scmp.eq.s32.totalorder %s23, 0
    %p217 = por %p215, %p216
    %p218 = scmp.ne.s32.totalorder %s206, %s207
    %p219 = scmp.eq.s32.totalorder %s24, 1
    %p220 = por %p218, %p219
    %p222 = scmp.ne.s32.totalorder %s207, %s221
    %p223 = scmp.eq.s32.totalorder %s24, 0
    %p224 = por %p222, %p223
    %s226 = sadd.s32 %s225, 1
    %p229 = scmp.eq.s32.totalorder %s18, 1
    %p230 = scmp.ne.s32.totalorder %s225, %s227
    %p231 = scmp.eq.s32.totalorder %s18, 0
    %p232 = por %p230, %p231
    %p233 = scmp.ne.s32.totalorder %s225, %s227
    %p234 = scmp.eq.s32.totalorder %s23, 1
    %p235 = por %p233, %p234
    %p236 = scmp.ne.s32.totalorder %s227, %s228
    %p237 = scmp.eq.s32.totalorder %s23, 0
    %p238 = por %p236, %p237
    %p239 = scmp.ne.s32.totalorder %s227, %s228
    %p240 = scmp.eq.s32.totalorder %s24, 1
    %p241 = por %p239, %p240
    %p243 = scmp.ne.s32.totalorder %s228, %s242
    %p244 = scmp.eq.s32.totalorder %s24, 0
    %p245 = por %p243, %p244
    %s247 = sadd.s32 %s246, 1
    %p250 = scmp.eq.s32.totalorder %s18, 1
    %p251 = scmp.ne.s32.totalorder %s246, %s248
    %p252 = scmp.eq.s32.totalorder %s18, 0
    %p253 = por %p251, %p252
    %p254 = scmp.ne.s32.totalorder %s246, %s248
    %p255 = scmp.eq.s32.totalorder %s23, 1
    %p256 = por %p254, %p255
    %p257 = scmp.ne.s32.totalorder %s248, %s249
    %p258 = scmp.eq.s32.totalorder %s23, 0
    %p259 = por %p257, %p258
    %p260 = scmp.ne.s32.totalorder %s248, %s249
    %p261 = scmp.eq.s32.totalorder %s24, 1
    %p262 = por %p260, %p261
    %p264 = scmp.ne.s32.totalorder %s249, %s263
    %p265 = scmp.eq.s32.totalorder %s24, 0
    %p266 = por %p264, %p265
    %s267 = ssub.s32 %s18, %s25
    %p268 = scmp.eq.s32.totalorder %s267, 0
    %s270 = sadd.s32 %s269, 1
    %s271 = scalar_select %p268, %s269, %s270
    %p274 = pneg %p268
    %p275 = scmp.eq.s32.totalorder %s18, 1
    %p276 = por %p274, %p275
    %p277 = scmp.ne.s32.totalorder %s269, %s272
    %p278 = scmp.eq.s32.totalorder %s18, 0
    %p279 = por %p277, %p278
    %p280 = scmp.ne.s32.totalorder %s269, %s272
    %p281 = scmp.eq.s32.totalorder %s23, 1
    %p282 = por %p280, %p281
    %p283 = scmp.ne.s32.totalorder %s272, %s273
    %p284 = scmp.eq.s32.totalorder %s23, 0
    %p285 = por %p283, %p284
    %p286 = scmp.ne.s32.totalorder %s272, %s273
    %p287 = scmp.eq.s32.totalorder %s24, 1
    %p288 = por %p286, %p287
    %p290 = scmp.ne.s32.totalorder %s273, %s289
    %p291 = scmp.eq.s32.totalorder %s24, 0
    %p292 = por %p290, %p291
    %p293 = scmp.le.s32.totalorder 1, %s18
    %p294 = scmp.lt.s32.totalorder %s18, 3
    %p295 = pnand %p293, %p294
    %p296 = pneg %p295
    // Predicated region
    $region9: #{tpu_custom_call.1} parent=5 // pred_check
      _
    $region10: #{tpu_custom_call.1} parent=5 // pred_check_branch
      %298 = sbr.rel (%p295) target = $region12
    $region11: #{tpu_custom_call.1} parent=5 // pred_region
      %s299 = ssub.s32 %s18, 1
      // Predicated region
      $region13: #{tpu_custom_call.1} parent=11 // pred_check
        %p300 = pneg %p91
      $region14: #{tpu_custom_call.1} parent=11 // pred_check_branch
        %302 = sbr.rel (%p300) target = $region16
      $region15: #{tpu_custom_call.1} parent=11 // pred_region
        _
      $region16: #{tpu_custom_call.1} parent=11 // pred_fallthru
        _
      // Predicated region
      $region17: #{tpu_custom_call.1} parent=11 // pred_check
        %p303 = pneg %p112
      $region18: #{tpu_custom_call.1} parent=11 // pred_check_branch
        %305 = sbr.rel (%p303) target = $region20
      $region19: #{tpu_custom_call.1} parent=11 // pred_region
        _
      $region20: #{tpu_custom_call.1} parent=11 // pred_fallthru
        _
      // Predicated region
      $region21: #{tpu_custom_call.1} parent=11 // pred_check
        %p306 = pneg %p133
      $region22: #{tpu_custom_call.1} parent=11 // pred_check_branch
        %308 = sbr.rel (%p306) target = $region24
      $region23: #{tpu_custom_call.1} parent=11 // pred_region
        _
      $region24: #{tpu_custom_call.1} parent=11 // pred_fallthru
        _
      // Predicated region
      $region25: #{tpu_custom_call.1} parent=11 // pred_check
        %p309 = pneg %p154
      $region26: #{tpu_custom_call.1} parent=11 // pred_check_branch
        %311 = sbr.rel (%p309) target = $region28
      $region27: #{tpu_custom_call.1} parent=11 // pred_region
        _
      $region28: #{tpu_custom_call.1} parent=11 // pred_fallthru
        _
      // Predicated region
      $region29: #{tpu_custom_call.1} parent=11 // pred_check
        %p312 = pneg %p175
      $region30: #{tpu_custom_call.1} parent=11 // pred_check_branch
        %314 = sbr.rel (%p312) target = $region32
      $region31: #{tpu_custom_call.1} parent=11 // pred_region
        _
      $region32: #{tpu_custom_call.1} parent=11 // pred_fallthru
        _
      // Predicated region
      $region33: #{tpu_custom_call.1} parent=11 // pred_check
        %p315 = pneg %p196
      $region34: #{tpu_custom_call.1} parent=11 // pred_check_branch
        %317 = sbr.rel (%p315) target = $region36
      $region35: #{tpu_custom_call.1} parent=11 // pred_region
        _
      $region36: #{tpu_custom_call.1} parent=11 // pred_fallthru
        _
      // Predicated region
      $region37: #{tpu_custom_call.1} parent=11 // pred_check
        %p318 = pneg %p217
      $region38: #{tpu_custom_call.1} parent=11 // pred_check_branch
        %320 = sbr.rel (%p318) target = $region40
      $region39: #{tpu_custom_call.1} parent=11 // pred_region
        _
      $region40: #{tpu_custom_call.1} parent=11 // pred_fallthru
        _
      // Predicated region
      $region41: #{tpu_custom_call.1} parent=11 // pred_check
        %p321 = pneg %p238
      $region42: #{tpu_custom_call.1} parent=11 // pred_check_branch
        %323 = sbr.rel (%p321) target = $region44
      $region43: #{tpu_custom_call.1} parent=11 // pred_region
        _
      $region44: #{tpu_custom_call.1} parent=11 // pred_fallthru
        _
      // Predicated region
      $region45: #{tpu_custom_call.1} parent=11 // pred_check
        %p324 = pneg %p259
      $region46: #{tpu_custom_call.1} parent=11 // pred_check_branch
        %326 = sbr.rel (%p324) target = $region48
      $region47: #{tpu_custom_call.1} parent=11 // pred_region
        _
      $region48: #{tpu_custom_call.1} parent=11 // pred_fallthru
        _
    $region12: #{tpu_custom_call.1} parent=5 // pred_fallthru
      _
    %p327 = scmp.lt.s32.totalorder %s18, 2
    // Predicated region
    $region49: #{tpu_custom_call.1} parent=5 // pred_check
      %p328 = pneg %p327
    $region50: #{tpu_custom_call.1} parent=5 // pred_check_branch
      %330 = sbr.rel (%p328) target = $region52
    $region51: #{tpu_custom_call.1} parent=5 // pred_region
      // Predicated region
      $region53: #{tpu_custom_call.1} parent=51 // pred_check
        %p331 = pneg %p38
      $region54: #{tpu_custom_call.1} parent=51 // pred_check_branch
        %333 = sbr.rel (%p331) target = $region56
      $region55: #{tpu_custom_call.1} parent=51 // pred_region
        %p334 = scmp.lt.s32.totalorder %s18, 1
        %s335 = scalar_select %p334, %s18, 1
        %s336 = smul.addr %s335, 8
        %s337 = scalar_lea.vmem %s0, %s336
      $region56: #{tpu_custom_call.1} parent=51 // pred_fallthru
        _
      // Predicated region
      $region57: #{tpu_custom_call.1} parent=51 // pred_check
        %p338 = pneg %p64
      $region58: #{tpu_custom_call.1} parent=51 // pred_check_branch
        %340 = sbr.rel (%p338) target = $region60
      $region59: #{tpu_custom_call.1} parent=51 // pred_region
        %s341 = smul.u32 9, %s18
        %p342 = scmp.lt.s32.totalorder %s341, 17
        %s343 = scalar_select %p342, %s341, 17
        %s344 = smul.addr %s343, 8
        %s345 = scalar_lea.vmem %s1, %s344
        %s346 = smul.u32 9, %s18
      $region60: #{tpu_custom_call.1} parent=51 // pred_fallthru
        _
    $region52: #{tpu_custom_call.1} parent=5 // pred_fallthru
      _
    %p347 = scmp.le.s32.totalorder 1, %s18
    %p348 = scmp.lt.s32.totalorder %s18, 3
    %p349 = pnand %p347, %p348
    %p350 = pneg %p349
    // Predicated region
    $region61: #{tpu_custom_call.1} parent=5 // pred_check
      _
    $region62: #{tpu_custom_call.1} parent=5 // pred_check_branch
      %352 = sbr.rel (%p349) target = $region64
    $region63: #{tpu_custom_call.1} parent=5 // pred_region
      %s353 = ssub.s32 %s18, 1
      %p354 = scmp.lt.s32.totalorder %s23, 1
      %s355 = scalar_select %p354, %s23, 1
      %s356 = smul.addr %s355, 8
      %s357 = scalar_lea.vmem %s0, %s356
      %p358 = pneg %p44
      %p359 = pneg %p41
      %s360 = smul.u32 9, %s23
      %p361 = scmp.lt.s32.totalorder %s360, 17
      %s362 = scalar_select %p361, %s360, 17
      %s363 = smul.addr %s362, 8
      %s364 = scalar_lea.vmem %s1, %s363
      %p365 = pneg %p70
      %p366 = pneg %p67
      %p367 = pneg %p91
      %p368 = pneg %p88
      %p369 = pneg %p112
      %p370 = pneg %p109
      %p371 = pneg %p133
      %p372 = pneg %p130
      %p373 = pneg %p154
      %p374 = pneg %p151
      %p375 = pneg %p175
      %p376 = pneg %p172
      %p377 = pneg %p196
      %p378 = pneg %p193
      %p379 = pneg %p217
      %p380 = pneg %p214
      %p381 = pneg %p238
      %p382 = pneg %p235
      %p383 = pneg %p259
      %p384 = pneg %p256
      %p385 = pneg %p285
      %p386 = pneg %p282
      %p387 = scmp.lt.s32.totalorder %s23, 1
      %s388 = scalar_select %p387, %s23, 1
      %s389 = smul.addr %s388, 8
      %s390 = scalar_lea.vmem %s11, %s389
      %p391 = scmp.lt.s32.totalorder %s23, 1
      %s392 = scalar_select %p391, %s23, 1
      %s393 = smul.addr %s392, 8
      %s394 = scalar_lea.vmem %s0, %s393
      %s395 = smul.u32 9, %s23
      %p396 = scmp.lt.s32.totalorder %s395, 17
      %s397 = scalar_select %p396, %s395, 17
      %s398 = smul.addr %s397, 8
      %s399 = scalar_lea.vmem %s1, %s398
      %s400 = smul.u32 9, %s23
      %p401 = scmp.lt.s32.totalorder %s23, 1
      %s402 = scalar_select %p401, %s23, 1
      %s403 = smul.addr %s402, 8
      %s404 = scalar_lea.vmem %s11, %s403
      %v406 = vld [vmem:[%s394] sm:$0xff]
      %v407 = vpack.c.bf16 %v406, %v406
      %v408 = vld [vmem:[%s4] sm:$0xf]
      %v409 = vld [vmem:[%s4 + $0x4] sm:$0xf]
      %v410 = vld [vmem:[%s4 + $0x8] sm:$0xf]
      %v411 = vld [vmem:[%s4 + $0xc] sm:$0xf]
      %v412 = vld [vmem:[%s4 + $0x10] sm:$0xf]
      %v413 = vld [vmem:[%s4 + $0x14] sm:$0xf]
      %v414 = vld [vmem:[%s4 + $0x18] sm:$0xf]
      %v415 = vld [vmem:[%s4 + $0x1c] sm:$0xf]
      %v424 = vunpack.c.l.b16 %v408
      %v425 = vunpack.c.l.b16 %v409
      %v426 = vunpack.c.l.b16 %v410
      %v427 = vunpack.c.l.b16 %v411
      %v428 = vunpack.c.l.b16 %v412
      %v429 = vunpack.c.l.b16 %v413
      %v430 = vunpack.c.l.b16 %v414
      %v431 = vunpack.c.l.b16 %v415
      %v432 = vpack.c.b16 %v425, %v424
      %v433 = vpack.c.b16 %v427, %v426
      %v434 = vpack.c.b16 %v429, %v428
      %v435 = vpack.c.b16 %v431, %v430
      %vm440 = vcmask 523264
      %v442 = vsel %vm440, %v407, 0
      %444 = vmatprep.subr.bf16.mxu0 0
      %445 = vmatpush1.bf16.msra.mxu0 0
      %446 = vmatprep.subr.bf16.mxu0 0
      %447 = vmatpush1.bf16.msra.mxu0 0
      %448 = vmatprep.subr.bf16.mxu0 0
      %449 = vmatpush1.bf16.msra.mxu0 0
      %450 = vmatprep.subr.bf16.mxu0 0
      %451 = vmatpush1.bf16.msra.mxu0 0
      %452 = vmatprep.subr.bf16.mxu0 0
      %453 = vmatpush1.bf16.msra.mxu0 %v435
      %454 = vmatprep.subr.bf16.mxu0 0
      %455 = vmatpush1.bf16.msra.mxu0 %v434
      %456 = vmatprep.subr.bf16.mxu0 0
      %457 = vmatpush1.bf16.msra.mxu0 %v433
      %458 = vmatprep.subr.bf16.mxu0 0
      %459 = vmatpush1.bf16.msra.mxu0 %v432
      %460 = vmatprep.subr.bf16.mxu0 0
      %461 = vmatpush2.bf16.msra.mxu0 0
      %462 = vmatprep.subr.bf16.mxu0 0
      %463 = vmatpush2.bf16.msra.mxu0 0
      %464 = vmatprep.subr.bf16.mxu0 0
      %465 = vmatpush2.bf16.msra.mxu0 0
      %466 = vmatprep.subr.bf16.mxu0 0
      %467 = vmatpush2.bf16.msra.mxu0 0
      %468 = vmatprep.subr.bf16.mxu0 0
      %469 = vmatpush2.bf16.msra.mxu0 0
      %470 = vmatprep.subr.bf16.mxu0 0
      %471 = vmatpush2.bf16.msra.mxu0 0
      %472 = vmatprep.subr.bf16.mxu0 0
      %473 = vmatpush2.bf16.msra.mxu0 0
      %474 = vmatprep.subr.bf16.mxu0 0
      %475 = vmatpush2.bf16.msra.mxu0 0
      %476 = vmatprep.mubr.bf16.mxu0 0
      %477 = vmatmul.mubr.bf16.gmra.mxu0 %v442
      %v478 = vpop.f32.mrf.mxu0
      %v479 = vadd.f32 0.0, %v478
      %v480 = vpop.f32.mrf.mxu0
      %v481 = vpop.f32.mrf.mxu0
      %v482 = vpop.f32.mrf.mxu0
      %483 = vdwg.mxu0
      %v484 = vld [vmem:[%s2] sm:$0xff]
      %v485 = vld [vmem:[%s2 + $0x8] sm:$0xff]
      %v486 = vld [vmem:[%s2 + $0x10] sm:$0xff]
      %v487 = vld [vmem:[%s2 + $0x18] sm:$0xff]
      %v488 = vld [vmem:[%s2 + $0x20] sm:$0xff]
      %v489 = vld [vmem:[%s2 + $0x28] sm:$0xff]
      %v490 = vld [vmem:[%s2 + $0x30] sm:$0xff]
      %v491 = vld [vmem:[%s2 + $0x38] sm:$0xff]
      %v492 = vld [vmem:[%s2 + $0x40] sm:$0xff]
      %v493 = vld [vmem:[%s399] sm:$0xff]
      %v494 = vld [vmem:[%s399 + $0x8] sm:$0xff]
      %v495 = vld [vmem:[%s399 + $0x10] sm:$0xff]
      %v496 = vld [vmem:[%s399 + $0x18] sm:$0xff]
      %v497 = vld [vmem:[%s399 + $0x20] sm:$0xff]
      %v498 = vld [vmem:[%s399 + $0x28] sm:$0xff]
      %v499 = vld [vmem:[%s399 + $0x30] sm:$0xff]
      %v500 = vld [vmem:[%s399 + $0x38] sm:$0xff]
      %v501 = vld [vmem:[%s399 + $0x40] sm:$0xff]
      %v502 = vld [vmem:[%s5] sm:$0x1]
      %504 = vset.pattern.permute.xlu0 0
      %505 = vperm.xlu0 %504, %v493
      %v506 = vpop.permute.xlu0 %505
      %509 = vset.pattern.permute.xlu0 0
      %510 = vperm.xlu0 %509, %v494
      %v511 = vpop.permute.xlu0 %510
      %514 = vset.pattern.permute.xlu0 0
      %515 = vperm.xlu0 %514, %v495
      %v516 = vpop.permute.xlu0 %515
      %519 = vset.pattern.permute.xlu0 0
      %520 = vperm.xlu0 %519, %v496
      %v521 = vpop.permute.xlu0 %520
      %524 = vset.pattern.permute.xlu0 0
      %525 = vperm.xlu0 %524, %v497
      %v526 = vpop.permute.xlu0 %525
      %529 = vset.pattern.permute.xlu0 0
      %530 = vperm.xlu0 %529, %v498
      %v531 = vpop.permute.xlu0 %530
      %534 = vset.pattern.permute.xlu0 0
      %535 = vperm.xlu0 %534, %v499
      %v536 = vpop.permute.xlu0 %535
      %539 = vset.pattern.permute.xlu0 0
      %540 = vperm.xlu0 %539, %v500
      %v541 = vpop.permute.xlu0 %540
      %544 = vset.pattern.permute.xlu0 0
      %545 = vperm.xlu0 %544, %v501
      %v546 = vpop.permute.xlu0 %545
      %v549 = vlaneseq
      %v550 = vshrl.u32 %v549, 7
      %v551 = vsub.s32 0, %v550
      %v552 = vrot.slane %v502, %v551
      %v554 = vmul.f32 %v506, %v552
      %v555 = vmul.f32 %v511, %v552
      %v556 = vmul.f32 %v516, %v552
      %v557 = vmul.f32 %v521, %v552
      %v558 = vmul.f32 %v526, %v552
      %v559 = vmul.f32 %v531, %v552
      %v560 = vmul.f32 %v536, %v552
      %v561 = vmul.f32 %v541, %v552
      %v562 = vmul.f32 %v546, %v552
      %vm563 = vcmask 64512
      %v565 = vsel %vm563, %v484, 0
      %v568 = vsel %vm563, %v485, 0
      %v571 = vsel %vm563, %v486, 0
      %v574 = vsel %vm563, %v487, 0
      %v577 = vsel %vm563, %v488, 0
      %v580 = vsel %vm563, %v489, 0
      %v583 = vsel %vm563, %v490, 0
      %v586 = vsel %vm563, %v491, 0
      %v589 = vsel %vm563, %v492, 0
      %591 = vmatprep.subr.mxu0 0.0
      %592 = vmatpush1.msra.mxu0 0.0
      %593 = vmatprep.subr.mxu0 0.0
      %594 = vmatpush1.msra.mxu0 0.0
      %595 = vmatprep.subr.mxu0 0.0
      %596 = vmatpush1.msra.mxu0 0.0
      %597 = vmatprep.subr.mxu0 0.0
      %598 = vmatpush1.msra.mxu0 0.0
      %599 = vmatprep.subr.mxu0 0.0
      %600 = vmatpush1.msra.mxu0 0.0
      %601 = vmatprep.subr.mxu0 0.0
      %602 = vmatpush1.msra.mxu0 0.0
      %603 = vmatprep.subr.mxu0 0.0
      %604 = vmatpush1.msra.mxu0 0.0
      %605 = vmatprep.subr.mxu0 0.0
      %606 = vmatpush1.msra.mxu0 0.0
      %607 = vmatprep.subr.mxu0 0.0
      %608 = vmatpush1.msra.mxu0 0.0
      %609 = vmatprep.subr.mxu0 0.0
      %610 = vmatpush1.msra.mxu0 0.0
      %611 = vmatprep.subr.mxu0 0.0
      %612 = vmatpush1.msra.mxu0 0.0
      %613 = vmatprep.subr.mxu0 0.0
      %614 = vmatpush1.msra.mxu0 0.0
      %615 = vmatprep.subr.mxu0 0.0
      %616 = vmatpush1.msra.mxu0 0.0
      %617 = vmatprep.subr.mxu0 0.0
      %618 = vmatpush1.msra.mxu0 0.0
      %619 = vmatprep.subr.mxu0 0.0
      %620 = vmatpush1.msra.mxu0 0.0
      %621 = vmatprep.subr.mxu0 0.0
      %622 = vmatpush1.msra.mxu0 %v479
      %623 = vmatprep.subr.mxu0 0.0
      %624 = vmatpush2.msra.mxu0 0.0
      %625 = vmatprep.subr.mxu0 0.0
      %626 = vmatpush2.msra.mxu0 0.0
      %627 = vmatprep.subr.mxu0 0.0
      %628 = vmatpush2.msra.mxu0 0.0
      %629 = vmatprep.subr.mxu0 0.0
      %630 = vmatpush2.msra.mxu0 0.0
      %631 = vmatprep.subr.mxu0 0.0
      %632 = vmatpush2.msra.mxu0 0.0
      %633 = vmatprep.subr.mxu0 0.0
      %634 = vmatpush2.msra.mxu0 0.0
      %635 = vmatprep.subr.mxu0 0.0
      %636 = vmatpush2.msra.mxu0 0.0
      %637 = vmatprep.subr.mxu0 0.0
      %638 = vmatpush2.msra.mxu0 0.0
      %639 = vmatprep.subr.mxu0 0.0
      %640 = vmatpush2.msra.mxu0 0.0
      %641 = vmatprep.subr.mxu0 0.0
      %642 = vmatpush2.msra.mxu0 0.0
      %643 = vmatprep.subr.mxu0 0.0
      %644 = vmatpush2.msra.mxu0 0.0
      %645 = vmatprep.subr.mxu0 0.0
      %646 = vmatpush2.msra.mxu0 0.0
      %647 = vmatprep.subr.mxu0 0.0
      %648 = vmatpush2.msra.mxu0 0.0
      %649 = vmatprep.subr.mxu0 0.0
      %650 = vmatpush2.msra.mxu0 0.0
      %651 = vmatprep.subr.mxu0 0.0
      %652 = vmatpush2.msra.mxu0 0.0
      %653 = vmatprep.subr.mxu0 0.0
      %654 = vmatpush2.msra.mxu0 0.0
      %655 = vmatprep.mubr.f32.mxu0 0.0
      %656 = vmatmul.mubr.f32.gmra.mxu0 %v565
      %v657 = vpop.f32.mrf.mxu0
      %v658 = vadd.f32 %v554, %v657
      %v659 = vpop.f32.mrf.mxu0
      %660 = vmatprep.mubr.f32.mxu0 0.0
      %661 = vmatmul.mubr.f32.gmra.mxu0 %v568
      %v662 = vpop.f32.mrf.mxu0
      %v663 = vadd.f32 %v555, %v662
      %v664 = vpop.f32.mrf.mxu0
      %665 = vmatprep.mubr.f32.mxu0 0.0
      %666 = vmatmul.mubr.f32.gmra.mxu0 %v571
      %v667 = vpop.f32.mrf.mxu0
      %v668 = vadd.f32 %v556, %v667
      %v669 = vpop.f32.mrf.mxu0
      %670 = vmatprep.mubr.f32.mxu0 0.0
      %671 = vmatmul.mubr.f32.gmra.mxu0 %v574
      %v672 = vpop.f32.mrf.mxu0
      %v673 = vadd.f32 %v557, %v672
      %v674 = vpop.f32.mrf.mxu0
      %675 = vmatprep.mubr.f32.mxu0 0.0
      %676 = vmatmul.mubr.f32.gmra.mxu0 %v577
      %v677 = vpop.f32.mrf.mxu0
      %v678 = vadd.f32 %v558, %v677
      %v679 = vpop.f32.mrf.mxu0
      %680 = vmatprep.mubr.f32.mxu0 0.0
      %681 = vmatmul.mubr.f32.gmra.mxu0 %v580
      %v682 = vpop.f32.mrf.mxu0
      %v683 = vadd.f32 %v559, %v682
      %v684 = vpop.f32.mrf.mxu0
      %685 = vmatprep.mubr.f32.mxu0 0.0
      %686 = vmatmul.mubr.f32.gmra.mxu0 %v583
      %v687 = vpop.f32.mrf.mxu0
      %v688 = vadd.f32 %v560, %v687
      %v689 = vpop.f32.mrf.mxu0
      %690 = vmatprep.mubr.f32.mxu0 0.0
      %691 = vmatmul.mubr.f32.gmra.mxu0 %v586
      %v692 = vpop.f32.mrf.mxu0
      %v693 = vadd.f32 %v561, %v692
      %v694 = vpop.f32.mrf.mxu0
      %695 = vmatprep.mubr.f32.mxu0 0.0
      %696 = vmatmul.mubr.f32.gmra.mxu0 %v589
      %v697 = vpop.f32.mrf.mxu0
      %v698 = vadd.f32 %v562, %v697
      %v699 = vpop.f32.mrf.mxu0
      %700 = vdwg.mxu0
      %v701 = vld [vmem:[%s6] sm:$0x1]
      %v703 = vlaneseq
      %v704 = vshrl.u32 %v703, 7
      %v705 = vsub.s32 0, %v704
      %v706 = vrot.slane %v701, %v705
      %v708 = vadd.f32 %v658, %v706
      %v709 = vadd.f32 %v663, %v706
      %v710 = vadd.f32 %v668, %v706
      %v711 = vadd.f32 %v673, %v706
      %v712 = vadd.f32 %v678, %v706
      %v713 = vadd.f32 %v683, %v706
      %v714 = vadd.f32 %v688, %v706
      %v715 = vadd.f32 %v693, %v706
      %v716 = vadd.f32 %v698, %v706
      %v717 = vmax.f32 %v708, 0.0
      %v718 = vmax.f32 %v709, 0.0
      %v719 = vmax.f32 %v710, 0.0
      %v720 = vmax.f32 %v711, 0.0
      %v721 = vmax.f32 %v712, 0.0
      %v722 = vmax.f32 %v713, 0.0
      %v723 = vmax.f32 %v714, 0.0
      %v724 = vmax.f32 %v715, 0.0
      %v725 = vmax.f32 %v716, 0.0
      %v726 = vpack.c.bf16 %v718, %v717
      %v727 = vpack.c.bf16 %v720, %v719
      %v728 = vpack.c.bf16 %v722, %v721
      %v729 = vpack.c.bf16 %v724, %v723
      %v730 = vpack.c.bf16 %v725, %v725
      %v731 = vld [vmem:[%s7] sm:$0xf]
      %v732 = vld [vmem:[%s7 + $0x4] sm:$0xf]
      %v733 = vld [vmem:[%s7 + $0x8] sm:$0xf]
      %v734 = vld [vmem:[%s7 + $0xc] sm:$0xf]
      %v735 = vld [vmem:[%s7 + $0x10] sm:$0xf]
      %v736 = vld [vmem:[%s7 + $0x14] sm:$0xf]
      %v737 = vld [vmem:[%s7 + $0x18] sm:$0xf]
      %v738 = vld [vmem:[%s7 + $0x1c] sm:$0xf]
      %v739 = vld [vmem:[%s7 + $0x20] sm:$0xf]
      %v740 = vld [vmem:[%s7 + $0x24] sm:$0xf]
      %v741 = vld [vmem:[%s7 + $0x28] sm:$0xf]
      %v742 = vld [vmem:[%s7 + $0x2c] sm:$0xf]
      %v743 = vld [vmem:[%s7 + $0x30] sm:$0xf]
      %v744 = vld [vmem:[%s7 + $0x34] sm:$0xf]
      %v745 = vld [vmem:[%s7 + $0x38] sm:$0xf]
      %v746 = vld [vmem:[%s7 + $0x3c] sm:$0xf]
      %v747 = vld [vmem:[%s8] sm:$0x1]
      %v749 = vlaneseq
      %v750 = vshrl.u32 %v749, 7
      %v751 = vsub.s32 0, %v750
      %v752 = vrot.slane %v747, %v751
      %v770 = vunpack.c.l.b16 %v731
      %v771 = vunpack.c.l.b16 %v732
      %v772 = vunpack.c.l.b16 %v733
      %v773 = vunpack.c.l.b16 %v734
      %v774 = vunpack.c.l.b16 %v735
      %v775 = vunpack.c.l.b16 %v736
      %v776 = vunpack.c.l.b16 %v737
      %v777 = vunpack.c.l.b16 %v738
      %v778 = vunpack.c.l.b16 %v739
      %v779 = vunpack.c.l.b16 %v740
      %v780 = vunpack.c.l.b16 %v741
      %v781 = vunpack.c.l.b16 %v742
      %v782 = vunpack.c.l.b16 %v743
      %v783 = vunpack.c.l.b16 %v744
      %v784 = vunpack.c.l.b16 %v745
      %v785 = vunpack.c.l.b16 %v746
      %v786 = vpack.c.b16 %v771, %v770
      %v787 = vpack.c.b16 %v773, %v772
      %v788 = vpack.c.b16 %v775, %v774
      %v789 = vpack.c.b16 %v777, %v776
      %v790 = vpack.c.b16 %v779, %v778
      %v791 = vpack.c.b16 %v781, %v780
      %v792 = vpack.c.b16 %v783, %v782
      %v793 = vpack.c.b16 %v785, %v784
      %802 = vmatprep.subr.bf16.mxu0 0
      %803 = vmatpush1.bf16.msra.mxu0 %v793
      %804 = vmatprep.subr.bf16.mxu0 0
      %805 = vmatpush1.bf16.msra.mxu0 %v792
      %806 = vmatprep.subr.bf16.mxu0 0
      %807 = vmatpush1.bf16.msra.mxu0 %v791
      %808 = vmatprep.subr.bf16.mxu0 0
      %809 = vmatpush1.bf16.msra.mxu0 %v790
      %810 = vmatprep.subr.bf16.mxu0 0
      %811 = vmatpush1.bf16.msra.mxu0 %v789
      %812 = vmatprep.subr.bf16.mxu0 0
      %813 = vmatpush1.bf16.msra.mxu0 %v788
      %814 = vmatprep.subr.bf16.mxu0 0
      %815 = vmatpush1.bf16.msra.mxu0 %v787
      %816 = vmatprep.subr.bf16.mxu0 0
      %817 = vmatpush1.bf16.msra.mxu0 %v786
      %818 = vmatprep.subr.bf16.mxu0 0
      %819 = vmatpush2.bf16.msra.mxu0 0
      %820 = vmatprep.subr.bf16.mxu0 0
      %821 = vmatpush2.bf16.msra.mxu0 0
      %822 = vmatprep.subr.bf16.mxu0 0
      %823 = vmatpush2.bf16.msra.mxu0 0
      %824 = vmatprep.subr.bf16.mxu0 0
      %825 = vmatpush2.bf16.msra.mxu0 0
      %826 = vmatprep.subr.bf16.mxu0 0
      %827 = vmatpush2.bf16.msra.mxu0 0
      %828 = vmatprep.subr.bf16.mxu0 0
      %829 = vmatpush2.bf16.msra.mxu0 0
      %830 = vmatprep.subr.bf16.mxu0 0
      %831 = vmatpush2.bf16.msra.mxu0 0
      %832 = vmatprep.subr.bf16.mxu0 0
      %833 = vmatpush2.bf16.msra.mxu0 0
      %834 = vmatprep.mubr.bf16.mxu0 0
      %835 = vmatmul.mubr.bf16.gmra.mxu0 %v726
      %v836 = vpop.f32.mrf.mxu0
      %v837 = vadd.f32 %v752, %v836
      %v838 = vpop.f32.mrf.mxu0
      %v839 = vpop.f32.mrf.mxu0
      %v840 = vadd.f32 %v752, %v839
      %v841 = vpop.f32.mrf.mxu0
      %842 = vmatprep.mubr.bf16.mxu0 0
      %843 = vmatmul.mubr.bf16.gmra.mxu0 %v727
      %v844 = vpop.f32.mrf.mxu0
      %v845 = vadd.f32 %v752, %v844
      %v846 = vpop.f32.mrf.mxu0
      %v847 = vpop.f32.mrf.mxu0
      %v848 = vadd.f32 %v752, %v847
      %v849 = vpop.f32.mrf.mxu0
      %850 = vmatprep.mubr.bf16.mxu0 0
      %851 = vmatmul.mubr.bf16.gmra.mxu0 %v728
      %v852 = vpop.f32.mrf.mxu0
      %v853 = vadd.f32 %v752, %v852
      %v854 = vpop.f32.mrf.mxu0
      %v855 = vpop.f32.mrf.mxu0
      %v856 = vadd.f32 %v752, %v855
      %v857 = vpop.f32.mrf.mxu0
      %858 = vmatprep.mubr.bf16.mxu0 0
      %859 = vmatmul.mubr.bf16.gmra.mxu0 %v729
      %v860 = vpop.f32.mrf.mxu0
      %v861 = vadd.f32 %v752, %v860
      %v862 = vpop.f32.mrf.mxu0
      %v863 = vpop.f32.mrf.mxu0
      %v864 = vadd.f32 %v752, %v863
      %v865 = vpop.f32.mrf.mxu0
      %866 = vmatprep.mubr.bf16.mxu0 0
      %867 = vmatmul.mubr.bf16.gmra.mxu0 %v730
      %v868 = vpop.f32.mrf.mxu0
      %v869 = vadd.f32 %v752, %v868
      %v870 = vpop.f32.mrf.mxu0
      %v871 = vpop.f32.mrf.mxu0
      %v872 = vpop.f32.mrf.mxu0
      %873 = vdwg.mxu0
      %v874 = vmax.f32 %v837, 0.0
      %v875 = vmax.f32 %v840, 0.0
      %v876 = vmax.f32 %v845, 0.0
      %v877 = vmax.f32 %v848, 0.0
      %v878 = vmax.f32 %v853, 0.0
      %v879 = vmax.f32 %v856, 0.0
      %v880 = vmax.f32 %v861, 0.0
      %v881 = vmax.f32 %v864, 0.0
      %v882 = vmax.f32 %v869, 0.0
      %v883 = vld [vmem:[%s9] sm:$0x1]
      %v885 = vlaneseq
      %v886 = vshrl.u32 %v885, 7
      %v887 = vsub.s32 0, %v886
      %v888 = vrot.slane %v883, %v887
      %v890 = vmul.f32 %v874, %v888
      %v891 = vmul.f32 %v875, %v888
      %v892 = vmul.f32 %v876, %v888
      %v893 = vmul.f32 %v877, %v888
      %v894 = vmul.f32 %v878, %v888
      %v895 = vmul.f32 %v879, %v888
      %v896 = vmul.f32 %v880, %v888
      %v897 = vmul.f32 %v881, %v888
      %v898 = vmul.f32 %v882, %v888
      %899 = vadd.xlane.f32.xlu0 %v890
      %v900 = vpop.xlane.xlu0 %899
      %901 = vadd.xlane.f32.xlu0 %v891
      %v902 = vpop.xlane.xlu0 %901
      %903 = vadd.xlane.f32.xlu0 %v892
      %v904 = vpop.xlane.xlu0 %903
      %905 = vadd.xlane.f32.xlu0 %v893
      %v906 = vpop.xlane.xlu0 %905
      %907 = vadd.xlane.f32.xlu0 %v894
      %v908 = vpop.xlane.xlu0 %907
      %909 = vadd.xlane.f32.xlu0 %v895
      %v910 = vpop.xlane.xlu0 %909
      %911 = vadd.xlane.f32.xlu0 %v896
      %v912 = vpop.xlane.xlu0 %911
      %913 = vadd.xlane.f32.xlu0 %v897
      %v914 = vpop.xlane.xlu0 %913
      %915 = vadd.xlane.f32.xlu0 %v898
      %v916 = vpop.xlane.xlu0 %915
      %s917 = sld [smem:[#allocation2]]
      %v918 = vstv %s917
      %v919 = vadd.f32 %v900, %v918
      %v920 = vadd.f32 %v902, %v918
      %v921 = vadd.f32 %v904, %v918
      %v922 = vadd.f32 %v906, %v918
      %v923 = vadd.f32 %v908, %v918
      %v924 = vadd.f32 %v910, %v918
      %v925 = vadd.f32 %v912, %v918
      %v926 = vadd.f32 %v914, %v918
      %v927 = vadd.f32 %v916, %v918
      %v928 = vmax.f32 %v919, %v923
      %v929 = vmax.f32 %v920, %v924
      %v930 = vmax.f32 %v921, %v925
      %v931 = vmax.f32 %v922, %v926
      %v932 = vmax.f32 %v928, %v927
      %v933 = vmax.f32 %v932, %v929
      %v934 = vmax.f32 %v930, %v931
      %v935 = vmax.f32 %v933, %v934
      %v936 = vrot.slane %v935, 4
      %v937 = vmax.f32 %v935, %v936
      %v938 = vrot.slane %v937, 2
      %v939 = vmax.f32 %v937, %v938
      %v940 = vrot.slane %v939, 1
      %v941 = vmax.f32 %v939, %v940
      %s942 = vtos %v941
      %v943 = vstv %s942
      %v944 = vsub.f32 %v919, %v943
      %v945 = vsub.f32 %v920, %v943
      %v946 = vsub.f32 %v921, %v943
      %v947 = vsub.f32 %v922, %v943
      %v948 = vsub.f32 %v923, %v943
      %v949 = vsub.f32 %v924, %v943
      %v950 = vsub.f32 %v925, %v943
      %v951 = vsub.f32 %v926, %v943
      %v952 = vsub.f32 %v927, %v943
      %v953 = vmul.f32 %v944, 1.442695
      %v954 = vpow.pop %v953
      %v955 = vmul.f32 %v945, 1.442695
      %v956 = vpow.pop %v955
      %v957 = vmul.f32 %v946, 1.442695
      %v958 = vpow.pop %v957
      %v959 = vmul.f32 %v947, 1.442695
      %v960 = vpow.pop %v959
      %v961 = vmul.f32 %v948, 1.442695
      %v962 = vpow.pop %v961
      %v963 = vmul.f32 %v949, 1.442695
      %v964 = vpow.pop %v963
      %v965 = vmul.f32 %v950, 1.442695
      %v966 = vpow.pop %v965
      %v967 = vmul.f32 %v951, 1.442695
      %v968 = vpow.pop %v967
      %v969 = vmul.f32 %v952, 1.442695
      %v970 = vpow.pop %v969
      %v971 = vld [vmem:[%s3] sm:$0xff]
      %vm972 = vcmask 588800
      %v974 = vsel %vm972, %v971, 0
      %976 = vmatprep.subr.mxu0 0.0
      %977 = vmatpush1.msra.mxu0 0.0
      %978 = vmatprep.subr.mxu0 0.0
      %979 = vmatpush1.msra.mxu0 0.0
      %980 = vmatprep.subr.mxu0 0.0
      %981 = vmatpush1.msra.mxu0 0.0
      %982 = vmatprep.subr.mxu0 0.0
      %983 = vmatpush1.msra.mxu0 0.0
      %984 = vmatprep.subr.mxu0 0.0
      %985 = vmatpush1.msra.mxu0 0.0
      %986 = vmatprep.subr.mxu0 0.0
      %987 = vmatpush1.msra.mxu0 0.0
      %988 = vmatprep.subr.mxu0 0.0
      %989 = vmatpush1.msra.mxu0 0.0
      %990 = vmatprep.subr.mxu0 0.0
      %991 = vmatpush1.msra.mxu0 %v970
      %992 = vmatprep.subr.mxu0 0.0
      %993 = vmatpush1.msra.mxu0 %v968
      %994 = vmatprep.subr.mxu0 0.0
      %995 = vmatpush1.msra.mxu0 %v966
      %996 = vmatprep.subr.mxu0 0.0
      %997 = vmatpush1.msra.mxu0 %v964
      %998 = vmatprep.subr.mxu0 0.0
      %999 = vmatpush1.msra.mxu0 %v962
      %1000 = vmatprep.subr.mxu0 0.0
      %1001 = vmatpush1.msra.mxu0 %v960
      %1002 = vmatprep.subr.mxu0 0.0
      %1003 = vmatpush1.msra.mxu0 %v958
      %1004 = vmatprep.subr.mxu0 0.0
      %1005 = vmatpush1.msra.mxu0 %v956
      %1006 = vmatprep.subr.mxu0 0.0
      %1007 = vmatpush1.msra.mxu0 %v954
      %1008 = vmatprep.subr.mxu0 0.0
      %1009 = vmatpush2.msra.mxu0 0.0
      %1010 = vmatprep.subr.mxu0 0.0
      %1011 = vmatpush2.msra.mxu0 0.0
      %1012 = vmatprep.subr.mxu0 0.0
      %1013 = vmatpush2.msra.mxu0 0.0
      %1014 = vmatprep.subr.mxu0 0.0
      %1015 = vmatpush2.msra.mxu0 0.0
      %1016 = vmatprep.subr.mxu0 0.0
      %1017 = vmatpush2.msra.mxu0 0.0
      %1018 = vmatprep.subr.mxu0 0.0
      %1019 = vmatpush2.msra.mxu0 0.0
      %1020 = vmatprep.subr.mxu0 0.0
      %1021 = vmatpush2.msra.mxu0 0.0
      %1022 = vmatprep.subr.mxu0 0.0
      %1023 = vmatpush2.msra.mxu0 0.0
      %1024 = vmatprep.subr.mxu0 0.0
      %1025 = vmatpush2.msra.mxu0 0.0
      %1026 = vmatprep.subr.mxu0 0.0
      %1027 = vmatpush2.msra.mxu0 0.0
      %1028 = vmatprep.subr.mxu0 0.0
      %1029 = vmatpush2.msra.mxu0 0.0
      %1030 = vmatprep.subr.mxu0 0.0
      %1031 = vmatpush2.msra.mxu0 0.0
      %1032 = vmatprep.subr.mxu0 0.0
      %1033 = vmatpush2.msra.mxu0 0.0
      %1034 = vmatprep.subr.mxu0 0.0
      %1035 = vmatpush2.msra.mxu0 0.0
      %1036 = vmatprep.subr.mxu0 0.0
      %1037 = vmatpush2.msra.mxu0 0.0
      %1038 = vmatprep.subr.mxu0 0.0
      %1039 = vmatpush2.msra.mxu0 0.0
      %1040 = vmatprep.mubr.f32.mxu0 0.0
      %1041 = vmatmul.mubr.f32.gmra.mxu0 %v974
      %v1042 = vpop.f32.mrf.mxu0
      %v1043 = vadd.f32 0.0, %v1042
      %v1044 = vpop.f32.mrf.mxu0
      %1045 = vdwg.mxu0
      %v1046 = vmul.f32 %v954, 8.0
      %v1047 = vrcp.pop %v1043
      %v1048 = vmul.f32 %v1046, %v1047
      %vm1049 = vcmask 7168
      %1050 = vst.msk [vmem:[%s404] sm:$0xff] %vm1049, %v1048
      %p1051 = scmp.lt.s32.totalorder %s23, 1
      %s1052 = scalar_select %p1051, %s23, 1
      %s1053 = smul.addr %s1052, 8
      %s1054 = scalar_lea.vmem %s11, %s1053
      // Predicated region
      $region65: #{tpu_custom_call.1} parent=63 // pred_check
        %p1055 = pneg %p282
      $region66: #{tpu_custom_call.1} parent=63 // pred_check_branch
        %1057 = sbr.rel (%p1055) target = $region68
      $region67: #{tpu_custom_call.1} parent=63 // pred_region
        _
      $region68: #{tpu_custom_call.1} parent=63 // pred_fallthru
        _
    $region64: #{tpu_custom_call.1} parent=5 // pred_fallthru
      _
    %p1058 = scmp.le.s32.totalorder 2, %s18
    // Predicated region
    $region69: #{tpu_custom_call.1} parent=5 // pred_check
      %p1059 = pneg %p1058
    $region70: #{tpu_custom_call.1} parent=5 // pred_check_branch
      %1061 = sbr.rel (%p1059) target = $region72
    $region71: #{tpu_custom_call.1} parent=5 // pred_region
      %s1062 = ssub.s32 %s18, 2
      // Predicated region
      $region73: #{tpu_custom_call.1} parent=71 // pred_check
        %p1063 = pneg %p288
      $region74: #{tpu_custom_call.1} parent=71 // pred_check_branch
        %1065 = sbr.rel (%p1063) target = $region76
      $region75: #{tpu_custom_call.1} parent=71 // pred_region
        %p1066 = scmp.lt.s32.totalorder %s24, 1
        %s1067 = scalar_select %p1066, %s24, 1
        %s1068 = smul.addr %s1067, 8
        %s1069 = scalar_lea.vmem %s11, %s1068
      $region76: #{tpu_custom_call.1} parent=71 // pred_fallthru
        _
    $region72: #{tpu_custom_call.1} parent=5 // pred_fallthru
      _
  $region6: #{tpu_custom_call.1} parent=0 // loop_footer
    %s22 = sadd.s32 1, %s18
  $region7: #{tpu_custom_call.1} parent=0 // loop_footer_branch
    %17 = sbr.rel target = $region3
  $region8: #{tpu_custom_call.1} parent=0 // loop_exit
    _

</llo_original>
